<compile_context>
chip_gen: v7x
topology: tpu7x:2x2x1
jax: 0.10.0
libtpu: 0.0.40
codegen_flags: <defaults>
</compile_context>

<pallas_src>
import jax
import jax.numpy as jnp
from jax.experimental import pallas as pl
from jax.experimental.pallas import tpu as pltpu

_LANES = 512        # lane-dense width (multiple of 128)
_BLOCK_ROWS = 2048  # rows per grid step -> 2048 * 512 * 4B = 4 MiB f32 per block


def _linear_kernel(x_ref, w_ref, b_ref, o_ref):
    # x_ref: [BR, LANES] VMEM tile; w_ref, b_ref: [1, 1] scalars in SMEM.
    # nn.Linear(1, 1) reduces to out = x * w + b, broadcast over all elements.
    w = w_ref[0, 0]
    b = b_ref[0, 0]
    y = x_ref[...].astype(jnp.float32) * w + b
    o_ref[...] = y.astype(o_ref.dtype)


def _round_up(v, m):
    return ((v + m - 1) // m) * m


def lr_forward(x, weight, bias):
    """Pallas equivalent of Lr.forward.

    x:      [N, 1] (any float dtype; FMA computed in f32, output in x.dtype)
    weight: [1, 1] float32  (PyTorch nn.Linear weight, shape [out, in])
    bias:   [1]    float32
    returns [N, 1] in x.dtype
    """
    n = x.shape[0]
    out_dtype = x.dtype

    # --- Lane-dense reshape: flat (N,) -> (rows, _LANES) slab ----------------
    flat = x.reshape(-1)
    rows = max(pl.cdiv(n, _LANES), 1)
    padded_len = rows * _LANES
    if padded_len != n:
        # Only pad the tail fraction of a single lane-row (<= 511 elements).
        flat = jnp.pad(flat, (0, padded_len - n))
    slab = flat.reshape(rows, _LANES)

    # --- Block-size selection -------------------------------------------------
    if rows <= 8:
        # Tiny input: one block covering the full row extent (no (8,128) issue
        # since the block equals the array dims).
        block_rows = rows
    elif rows <= _BLOCK_ROWS:
        # Medium input: split into >= 2 sublane-aligned blocks so the
        # "parallel" grid axis can shard across v7x's two TensorCores.
        block_rows = _round_up(pl.cdiv(rows, 2), 8)
    else:
        block_rows = _BLOCK_ROWS
    grid = (pl.cdiv(rows, block_rows),)  # ragged last block handled by Pallas

    w2 = weight.reshape(1, 1).astype(jnp.float32)
    b2 = bias.reshape(1, 1).astype(jnp.float32)

    in_bytes = rows * _LANES * jnp.dtype(x.dtype).itemsize
    out_bytes = rows * _LANES * jnp.dtype(out_dtype).itemsize
    cost = pl.CostEstimate(
        flops=2 * n,
        transcendentals=0,
        bytes_accessed=in_bytes + out_bytes,
    )

    out_slab = pl.pallas_call(
        _linear_kernel,
        out_shape=jax.ShapeDtypeStruct((rows, _LANES), out_dtype),
        grid=grid,
        in_specs=[
            pl.BlockSpec((block_rows, _LANES), lambda i: (i, 0)),        # x slab tile
            pl.BlockSpec((1, 1), lambda i: (0, 0),
                         memory_space=pltpu.MemorySpace.SMEM),           # weight scalar
            pl.BlockSpec((1, 1), lambda i: (0, 0),
                         memory_space=pltpu.MemorySpace.SMEM),           # bias scalar
        ],
        out_specs=pl.BlockSpec((block_rows, _LANES), lambda i: (i, 0)),
        compiler_params=pltpu.CompilerParams(
            dimension_semantics=("parallel",),
            vmem_limit_bytes=32 << 20,
        ),
        cost_estimate=cost,
    )(slab, w2, b2)

    # Un-pad (only when padding was added) and restore the [N, 1] view.
    if padded_len != n:
        return out_slab.reshape(-1)[:n].reshape(n, 1)
    return out_slab.reshape(n, 1)


if __name__ == "__main__":
    key = jax.random.PRNGKey(0)
    kx, kw, kb = jax.random.split(key, 3)

    # Match the script: x = torch.rand([50, 1])
    x = jax.random.uniform(kx, (50, 1), dtype=jnp.float32)

    # nn.Linear(1, 1) init: U(-1/sqrt(in), 1/sqrt(in)) = U(-1, 1), deterministic here.
    weight = jax.random.uniform(kw, (1, 1), dtype=jnp.float32, minval=-1.0, maxval=1.0)
    bias = jax.random.uniform(kb, (1,), dtype=jnp.float32, minval=-1.0, maxval=1.0)

    out = lr_forward(x, weight, bias)
    out = jax.block_until_ready(out)

    # Reference check against plain JAX (same semantics as x @ W.T + b).
    ref = x @ weight.T + bias
    assert out.shape == (50, 1)
    assert jnp.allclose(out, ref, atol=1e-6), "mismatch vs reference"

    # Also exercise a ragged multi-block path (rows not a multiple of block_rows).
    x2 = jax.random.uniform(kx, (100_000, 1), dtype=jnp.float32)
    out2 = jax.block_until_ready(lr_forward(x2, weight, bias))
    ref2 = x2 @ weight.T + bias
    assert jnp.allclose(out2, ref2, atol=1e-6), "mismatch vs reference (large)"

    print("KERNEL_OK")
</pallas_src>

<mosaic_0001>
module attributes {stable_mosaic.version = 11 : i64} {
  func.func @_linear_kernel(%arg0: i32, %arg1: memref<1x512xf32, #tpu.memory_space<vmem>>, %arg2: memref<1x1xf32, #tpu.memory_space<smem>>, %arg3: memref<1x1xf32, #tpu.memory_space<smem>>, %arg4: memref<1x512xf32, #tpu.memory_space<vmem>>) attributes {dimension_semantics = [#tpu.dimension_semantics<parallel>], iteration_bounds = array<i64: 1>, scalar_prefetch = 0 : i64, scratch_operands = 0 : i64, tpu.core_type = #tpu.core_type<tc>, window_params = [{transform_indices = @transform_0, window_bounds = array<i64: 1, 512>}, {transform_indices = @transform_1, window_bounds = array<i64: 1, 1>}, {transform_indices = @transform_2, window_bounds = array<i64: 1, 1>}, {transform_indices = @transform_3, window_bounds = array<i64: 1, 512>}]} {
    %c0 = arith.constant 0 : index
    %c0_0 = arith.constant 0 : index
    %0 = memref.load %arg2[%c0, %c0_0] : memref<1x1xf32, #tpu.memory_space<smem>>
    %c0_1 = arith.constant 0 : index
    %c0_2 = arith.constant 0 : index
    %1 = memref.load %arg3[%c0_1, %c0_2] : memref<1x1xf32, #tpu.memory_space<smem>>
    %c0_3 = arith.constant 0 : index
    %c0_4 = arith.constant 0 : index
    %2 = vector.load %arg1[%c0_3, %c0_4] : memref<1x512xf32, #tpu.memory_space<vmem>>, vector<1x512xf32>
    %3 = vector.broadcast %0 : f32 to vector<1x512xf32>
    %4 = arith.mulf %2, %3 : vector<1x512xf32>
    %5 = vector.broadcast %1 : f32 to vector<1x512xf32>
    %6 = arith.addf %4, %5 : vector<1x512xf32>
    %c0_5 = arith.constant 0 : index
    %c0_6 = arith.constant 0 : index
    %7 = vector.load %arg4[%c0_5, %c0_6] : memref<1x512xf32, #tpu.memory_space<vmem>>, vector<1x512xf32>
    tpu.vector_store %arg4[%c0_5, %c0_6], %6 {strides = array<i32>} : memref<1x512xf32, #tpu.memory_space<vmem>>, vector<1x512xf32>,
    return
  }
  func.func @transform_0(%arg0: i32) -> (i32, i32) {
    %c0_i32 = arith.constant 0 : i32
    %c0_i32_0 = arith.constant 0 : i32
    return %arg0, %c0_i32 : i32, i32
  }
  func.func @transform_1(%arg0: i32) -> (i32, i32) {
    %c0_i32 = arith.constant 0 : i32
    %c0_i32_0 = arith.constant 0 : i32
    %c0_i32_1 = arith.constant 0 : i32
    return %c0_i32, %c0_i32_0 : i32, i32
  }
  func.func @transform_2(%arg0: i32) -> (i32, i32) {
    %c0_i32 = arith.constant 0 : i32
    %c0_i32_0 = arith.constant 0 : i32
    %c0_i32_1 = arith.constant 0 : i32
    return %c0_i32, %c0_i32_0 : i32, i32
  }
  func.func @transform_3(%arg0: i32) -> (i32, i32) {
    %c0_i32 = arith.constant 0 : i32
    %c0_i32_0 = arith.constant 0 : i32
    return %arg0, %c0_i32 : i32, i32
  }
}

</mosaic_0001>

<llo_original>
// kernel: tpu_custom_call.1
$region0: #{tpu_custom_call.1}
  #allocation0 [shape = 'u32[]', space=smem, size = 0x4, offset = 0x4, fixed_abs, tag = 'smem constant byte address 0x4 - core index']
  #allocation1 [shape = 'u32[144,128]{1,0:T(1,128)}', space=vmem, size = 0x12000, scoped, tag = 'internal scratch']
  #allocation2 [shape = 'f32[1,1]{1,0:T(1,128)S(6)}', space=smem, size = 0x200, scoped, tag = 'scoped memory for tpu_custom_call.1']
  #allocation3 [shape = 'f32[1,1]{1,0:T(1,128)S(6)}', space=smem, size = 0x200, scoped, tag = 'scoped memory for tpu_custom_call.1']
  %s0 = inlined_call_operand.vmem [shape: f32[1,512], index: 0, kind: input, shape index: {}]
  %s1 = inlined_call_operand.<no memory space> [shape: f32[1,1], index: 1, kind: input, shape index: {}]
  %s2 = inlined_call_operand.<no memory space> [shape: f32[1,1], index: 2, kind: input, shape index: {}]
  %s3 = inlined_call_operand.hbm [shape: f32[1,512], index: 3, kind: output, shape index: {}]
  %s4 = sld [smem:[#allocation0]]
  $region22: #{tpu_custom_call.1} parent=0
    _
  %s6 = ssub.s32 1, %s4
  %s7 = scalar_select 0, %s6, %s4
  %8 = sst [smem:[#allocation2]] %s1
  %9 = sst [smem:[#allocation3]] %s2
  $region1: #{tpu_custom_call.1} parent=0
    #allocation4 [shape = 'u8[2048]{0}', space=vmem, size = 0x800, scoped, tag = 'output window, operand 0, single buffered']
    #allocation5 [shape = 's32[1]{0}', space=sflag, size = 0x4, scoped, tag = 'scoped memory for tpu_custom_call.1']
    %10 = vsyncpa [#allocation5], 0
    // Predicated region
    $region2: #{tpu_custom_call.1} parent=1 // pred_check
      _
    $region3: #{tpu_custom_call.1} parent=1 // pred_check_branch
      %12 = sbr.rel (0) target = $region5
    $region4: #{tpu_custom_call.1} parent=1 // pred_region
      _
    $region5: #{tpu_custom_call.1} parent=1 // pred_fallthru
      _
    // Predicated region
    $region6: #{tpu_custom_call.1} parent=1 // pred_check
      _
    $region7: #{tpu_custom_call.1} parent=1 // pred_check_branch
      %14 = sbr.rel (0) target = $region9
    $region8: #{tpu_custom_call.1} parent=1 // pred_region
      _
    $region9: #{tpu_custom_call.1} parent=1 // pred_fallthru
      _
    // Predicated region
    $region10: #{tpu_custom_call.1} parent=1 // pred_check
      _
    $region11: #{tpu_custom_call.1} parent=1 // pred_check_branch
      %16 = sbr.rel (0) target = $region13
    $region12: #{tpu_custom_call.1} parent=1 // pred_region
      _
    $region13: #{tpu_custom_call.1} parent=1 // pred_fallthru
      _
    %s17 = sld [smem:[#allocation2]]
    %s18 = sld [smem:[#allocation3]]
    %v19 = vld [vmem:[%s0] sm:$0xf]
    %v20 = vstv %s17
    %v21 = vmul.f32 %v19, %v20
    %v22 = vstv %s18
    %v23 = vadd.f32 %v21, %v22
    %v24 = vlaneseq
    %vm25 = vcmp.ge.s32.totalorder %v24, 0
    %vm26 = vcmp.lt.s32.totalorder %v24, 512
    %vm27 = vmand %vm25, %vm26
    %28 = vst.msk [vmem:[#allocation4] sm:$0xf] %vm27, %v23
    // Predicated region
    $region14: #{tpu_custom_call.1} parent=1 // pred_check
      _
    $region15: #{tpu_custom_call.1} parent=1 // pred_check_branch
      %30 = sbr.rel (0) target = $region17
    $region16: #{tpu_custom_call.1} parent=1 // pred_region
      %s32 = ssub.s32 64, 64
      %33 = vsyncadd [#allocation5], %s32
      %s35 = sshll.u32 [#allocation4], 4
      %s36 = int_to_ptr.vmem [resolvable:$true] %s35
      %38 = dma.vmem_to_hbm [thread:$0]  %s36, 64, %s3, [#allocation5]
    $region17: #{tpu_custom_call.1} parent=1 // pred_fallthru
      _
    // Predicated region
    $region18: #{tpu_custom_call.1} parent=1 // pred_check
      _
    $region19: #{tpu_custom_call.1} parent=1 // pred_check_branch
      %40 = sbr.rel (0) target = $region21
    $region20: #{tpu_custom_call.1} parent=1 // pred_region
      %41 = dma.done [#allocation5], 64
    $region21: #{tpu_custom_call.1} parent=1 // pred_fallthru
      _
    %42 = vsyncpa [#allocation5], 1

</llo_original>
